<compile_context>
chip_gen: v6e
topology: v6e:2x2x1
jax: 0.10.0
libtpu: 0.0.40
codegen_flags: <defaults>
</compile_context>

<pallas_src>
import jax
import jax.numpy as jnp
from jax.experimental import pallas as pl
from jax.experimental.pallas import tpu as pltpu


def _cdiv(a, b):
    return -(-a // b)


def _round_up(x, m):
    return _cdiv(x, m) * m


def gcn_q_kernel(xt_ref, w1_ref, w2_ref, b2_ref, out_ref):
    # xt_ref : (d, block_b)  activations, features on sublanes, batch on lanes
    # w1_ref : (H, d)        first layer weight (PyTorch Linear layout)
    # w2_ref : (1, H)        second layer weight row (kept f32)
    # b2_ref : (1,)          scalar bias in SMEM
    # out_ref: (1, block_b)  lane-dense q row for this batch tile
    #
    # Layer 1 on the MXU: z = relu(W1 @ x_t), f32 accumulation, ReLU in f32.
    z = jnp.dot(w1_ref[...], xt_ref[...], preferred_element_type=jnp.float32)
    z = jnp.maximum(z, 0.0)                                   # (H, block_b) f32
    # Layer 2: (1, H) @ (H, block_b) -> (1, block_b).  K is z's leading dim, so
    # no transpose of z is ever materialized; output stays lane-dense.
    q = jnp.dot(w2_ref[...], z, preferred_element_type=jnp.float32)
    out_ref[...] = q + b2_ref[0]


def gcn_q_function(graph_emb, ac_first_prob, ac_second_hot, ac_third_prob,
                   w1, w2, b2, *, block_b=None, compute_dtype=jnp.bfloat16):
    """qpred = relu(cat(inputs) @ w1.T) @ w2.T + b2  -> shape (B, 1).

    Weights are in PyTorch nn.Linear layout: w1 (H, d), w2 (1, H), b2 (1,).
    """
    B = graph_emb.shape[0]
    d = (graph_emb.shape[1] + ac_first_prob.shape[1]
         + ac_second_hot.shape[1] + ac_third_prob.shape[1])
    H, d_w = w1.shape
    assert d_w == d, (w1.shape, d)
    assert w2.shape == (1, H) and b2.shape == (1,)

    if block_b is None:
        if B <= 512:
            # Small batch: one lane-aligned tile (keeps output stores unmasked).
            block_b = _round_up(max(B, 128), 128)
        else:
            # Big tiles amortize the ~0.35us/step cost; keep >= 2 tiles so both
            # v7x TensorCores get work; 256-aligned to fill the v6e/v7x MXU.
            block_b = min(2048, _round_up(_cdiv(B, 2), 256))
    assert block_b % 8 == 0, "block_b must be sublane-aligned"
    num_tiles = _cdiv(B, block_b)
    if num_tiles > 1:
        # Production path: multi-tile grids need 128-lane-aligned output rows.
        assert block_b % 128 == 0, "multi-tile grids require block_b % 128 == 0"
    Bp = num_tiles * block_b

    # Single wrapper-side copy: cast + concat + pad + transpose fuse into one
    # XLA fusion producing the (d, Bp) activation slab the kernel reads.  The
    # concat is free relative to the compute_dtype cast we do anyway, and lets
    # layer 1 run as one K=d matmul instead of four K<128 MXU passes.
    x = jnp.concatenate(
        [graph_emb, ac_first_prob, ac_second_hot, ac_third_prob],
        axis=-1).astype(compute_dtype)
    if Bp != B:
        x = jnp.pad(x, ((0, Bp - B), (0, 0)))
    xt = x.T                                    # (d, Bp)

    w1c = w1.astype(compute_dtype)              # (H, d)
    w2f = w2.astype(jnp.float32)                # tiny; keep layer 2 in f32
    b2f = b2.astype(jnp.float32)

    out = pl.pallas_call(
        gcn_q_kernel,
        out_shape=jax.ShapeDtypeStruct((1, Bp), jnp.float32),
        grid_spec=pltpu.PrefetchScalarGridSpec(
            num_scalar_prefetch=0,
            grid=(num_tiles,),
            in_specs=[
                pl.BlockSpec((d, block_b), lambda i: (0, i)),   # activation tile
                pl.BlockSpec((H, d), lambda i: (0, 0)),         # W1 (resident)
                pl.BlockSpec((1, H), lambda i: (0, 0)),         # W2 row (resident)
                pl.BlockSpec(memory_space=pltpu.MemorySpace.SMEM),  # bias scalar
            ],
            out_specs=pl.BlockSpec((1, block_b), lambda i: (0, i)),
        ),
        compiler_params=pltpu.CompilerParams(
            dimension_semantics=("parallel",),   # batch tiles shard across TCs
        ),
    )(xt, w1c, w2f, b2f)

    return out[0, :B][:, None]


def reference(ge, a1, a2, a3, w1, w2, b2):
    x = jnp.concatenate([ge, a1, a2, a3], axis=-1)
    z = jax.nn.relu(x @ w1.T)
    return z @ w2.T + b2[None, :]


if __name__ == "__main__":
    # Module-consistent small shapes:
    #   emb_size = 16        -> graph_emb dim   = 2*emb_size = 32
    #   len(FRAG_VOCAB) = 24 -> ac_first_prob dim            = 24
    #   len(CORE_VOCAB) = 16 -> ac_second_hot dim            = 16
    #   ac_third_prob dim                                     = 40
    #   d = 112, hidden = d // 2 = 56, out_dim = 1
    d_ge, d_a1, d_a2, d_a3 = 32, 24, 16, 40
    d = d_ge + d_a1 + d_a2 + d_a3
    H = d // 2

    key = jax.random.PRNGKey(0)
    ks = jax.random.split(key, 8)

    def make_inputs(B):
        ge = jax.random.normal(ks[0], (B, d_ge), dtype=jnp.float32)
        a1 = jax.nn.softmax(jax.random.normal(ks[1], (B, d_a1)), axis=-1).astype(jnp.float32)
        a2 = jax.nn.one_hot(jax.random.randint(ks[2], (B,), 0, d_a2), d_a2,
                            dtype=jnp.float32)
        a3 = jax.nn.softmax(jax.random.normal(ks[3], (B, d_a3)), axis=-1).astype(jnp.float32)
        return ge, a1, a2, a3

    # Weights in PyTorch nn.Linear layout: w1 (H, d), w2 (1, H), b2 (1,).
    w1 = jax.random.normal(ks[4], (H, d), dtype=jnp.float32) * (1.0 / jnp.sqrt(d))
    w2 = jax.random.normal(ks[5], (1, H), dtype=jnp.float32) * (1.0 / jnp.sqrt(H))
    b2 = jax.random.normal(ks[6], (1,), dtype=jnp.float32) * 0.1

    # Test 1: tiny batch (exercises 14 -> 128 padding), f32 compute, tight check.
    B1 = 14
    ins1 = make_inputs(B1)
    out1 = jax.block_until_ready(
        gcn_q_function(*ins1, w1, w2, b2, compute_dtype=jnp.float32))
    ref1 = reference(*ins1, w1, w2, b2)
    assert out1.shape == (B1, 1)
    assert jnp.allclose(out1, ref1, rtol=1e-4, atol=1e-4)

    # Test 2: multi-tile grid (3 x 128-lane tiles, 300 -> 384 padding) on the
    # production bf16-input / f32-accumulate path; looser tolerance for bf16.
    B2 = 300
    ins2 = make_inputs(B2)
    out2 = jax.block_until_ready(
        gcn_q_function(*ins2, w1, w2, b2, block_b=128, compute_dtype=jnp.bfloat16))
    ref2 = reference(*ins2, w1, w2, b2)
    assert out2.shape == (B2, 1)
    assert jnp.allclose(out2, ref2, rtol=5e-2, atol=5e-2)

    print("KERNEL_OK")
</pallas_src>

<mosaic_0001>
module attributes {stable_mosaic.version = 11 : i64} {
  func.func @gcn_q_kernel(%arg0: i32, %arg1: memref<112x128xf32, #tpu.memory_space<vmem>>, %arg2: memref<56x112xf32, #tpu.memory_space<vmem>>, %arg3: memref<1x56xf32, #tpu.memory_space<vmem>>, %arg4: memref<1xf32, #tpu.memory_space<smem>>, %arg5: memref<1x128xf32, #tpu.memory_space<vmem>>) attributes {dimension_semantics = [#tpu.dimension_semantics<parallel>], iteration_bounds = array<i64: 1>, scalar_prefetch = 0 : i64, scratch_operands = 0 : i64, tpu.core_type = #tpu.core_type<tc>, window_params = [{transform_indices = @transform_0, window_bounds = array<i64: 112, 128>}, {pipeline_mode = #tpu.pipeline_mode<synchronous>, transform_indices = @transform_1, window_bounds = array<i64: 56, 112>}, {pipeline_mode = #tpu.pipeline_mode<synchronous>, transform_indices = @transform_2, window_bounds = array<i64: 1, 56>}, {transform_indices = @transform_3, window_bounds = array<i64: 1>}, {transform_indices = @transform_4, window_bounds = array<i64: 1, 128>}]} {
    %c0 = arith.constant 0 : index
    %c0_0 = arith.constant 0 : index
    %0 = vector.load %arg2[%c0, %c0_0] : memref<56x112xf32, #tpu.memory_space<vmem>>, vector<56x112xf32>
    %c0_1 = arith.constant 0 : index
    %c0_2 = arith.constant 0 : index
    %1 = vector.load %arg1[%c0_1, %c0_2] : memref<112x128xf32, #tpu.memory_space<vmem>>, vector<112x128xf32>
    %cst = arith.constant dense<0.000000e+00> : vector<56x128xf32>
    %2 = tpu.matmul %0, %1, %cst {dimension_numbers = #tpu.dot_dimension_numbers<[1], [0], [0], [1], [0, 0, 1, 1], [], []>} : vector<56x112xf32>, vector<112x128xf32>, vector<56x128xf32> -> vector<56x128xf32>
    %cst_3 = arith.constant 0.000000e+00 : f32
    %3 = vector.broadcast %cst_3 : f32 to vector<56x128xf32>
    %4 = arith.maximumf %2, %3 : vector<56x128xf32>
    %c0_4 = arith.constant 0 : index
    %c0_5 = arith.constant 0 : index
    %5 = vector.load %arg3[%c0_4, %c0_5] : memref<1x56xf32, #tpu.memory_space<vmem>>, vector<1x56xf32>
    %cst_6 = arith.constant dense<0.000000e+00> : vector<1x128xf32>
    %6 = tpu.matmul %5, %4, %cst_6 {dimension_numbers = #tpu.dot_dimension_numbers<[1], [0], [0], [1], [0, 0, 1, 1], [], []>} : vector<1x56xf32>, vector<56x128xf32>, vector<1x128xf32> -> vector<1x128xf32>
    %c0_7 = arith.constant 0 : index
    %7 = memref.load %arg4[%c0_7] : memref<1xf32, #tpu.memory_space<smem>>
    %8 = vector.broadcast %7 : f32 to vector<1x128xf32>
    %9 = arith.addf %6, %8 : vector<1x128xf32>
    %c0_8 = arith.constant 0 : index
    %c0_9 = arith.constant 0 : index
    %10 = vector.load %arg5[%c0_8, %c0_9] : memref<1x128xf32, #tpu.memory_space<vmem>>, vector<1x128xf32>
    tpu.vector_store %arg5[%c0_8, %c0_9], %9 {strides = array<i32>} : memref<1x128xf32, #tpu.memory_space<vmem>>, vector<1x128xf32>,
    return
  }
  func.func @transform_0(%arg0: i32) -> (i32, i32) {
    %c0_i32 = arith.constant 0 : i32
    %c0_i32_0 = arith.constant 0 : i32
    return %c0_i32, %arg0 : i32, i32
  }
  func.func @transform_1(%arg0: i32) -> (i32, i32) {
    %c0_i32 = arith.constant 0 : i32
    %c0_i32_0 = arith.constant 0 : i32
    %c0_i32_1 = arith.constant 0 : i32
    return %c0_i32, %c0_i32_0 : i32, i32
  }
  func.func @transform_2(%arg0: i32) -> (i32, i32) {
    %c0_i32 = arith.constant 0 : i32
    %c0_i32_0 = arith.constant 0 : i32
    %c0_i32_1 = arith.constant 0 : i32
    return %c0_i32, %c0_i32_0 : i32, i32
  }
  func.func @transform_3(%arg0: i32) -> i32 {
    %c0_i32 = arith.constant 0 : i32
    %c0_i32_0 = arith.constant 0 : i32
    return %c0_i32 : i32
  }
  func.func @transform_4(%arg0: i32) -> (i32, i32) {
    %c0_i32 = arith.constant 0 : i32
    %c0_i32_0 = arith.constant 0 : i32
    return %c0_i32, %arg0 : i32, i32
  }
}

</mosaic_0001>

<llo_original>
// kernel: tpu_custom_call.1
$region0: #{tpu_custom_call.1}
  #allocation0 [shape = 'u32[]', space=smem, size = 0x4, offset = 0x4, fixed_abs, tag = 'smem constant byte address 0x4 - core index']
  #allocation1 [shape = 'u32[144,128]{1,0:T(1,128)}', space=vmem, size = 0x12000, scoped, tag = 'internal scratch']
  #allocation2 [shape = 'f32[1]{0:T(128)S(6)}', space=smem, size = 0x200, scoped, tag = 'scoped memory for tpu_custom_call.1']
  %s0 = inlined_call_operand.hbm [shape: f32[112,128], index: 0, kind: input, shape index: {}]
  %s1 = inlined_call_operand.hbm [shape: f32[56,112], index: 1, kind: input, shape index: {}]
  %s2 = inlined_call_operand.vmem [shape: f32[1,56], index: 2, kind: input, shape index: {}]
  %s3 = inlined_call_operand.<no memory space> [shape: f32[1], index: 3, kind: input, shape index: {}]
  %s4 = inlined_call_operand.hbm [shape: f32[1,128], index: 4, kind: output, shape index: {}]
  %s5 = sld [smem:[#allocation0]]
  $region34: #{tpu_custom_call.1} parent=0
    _
  %s7 = ssub.s32 1, %s5
  %s8 = scalar_select 0, %s7, %s5
  %9 = sst [smem:[#allocation2]] %s3
  $region1: #{tpu_custom_call.1} parent=0
    #allocation3 [shape = 'u8[57344]{0}', space=vmem, size = 0xe000, scoped, tag = 'input window, operand 0, single buffered']
    #allocation4 [shape = 's32[1]{0}', space=sflag, size = 0x4, scoped, tag = 'scoped memory for tpu_custom_call.1']
    #allocation5 [shape = 's32[1]{0}', space=sflag, size = 0x4, scoped, tag = 'scoped memory for tpu_custom_call.1']
    #allocation6 [shape = 'u8[28672]{0}', space=vmem, size = 0x7000, scoped, tag = 'input window, operand 1, single buffered']
    #allocation7 [shape = 's32[1]{0}', space=sflag, size = 0x4, scoped, tag = 'scoped memory for tpu_custom_call.1']
    #allocation8 [shape = 'u8[512]{0}', space=vmem, size = 0x400, scoped, tag = 'output window, operand 0, single buffered']
    %10 = vsyncpa [#allocation4], 0
    %11 = vsyncpa [#allocation7], 0
    %12 = vsyncpa [#allocation5], 0
    // Predicated region
    $region2: #{tpu_custom_call.1} parent=1 // pred_check
      _
    $region3: #{tpu_custom_call.1} parent=1 // pred_check_branch
      %14 = sbr.rel (0) target = $region5
    $region4: #{tpu_custom_call.1} parent=1 // pred_region
      %s16 = ssub.s32 1792, 1792
      %17 = vsyncadd [#allocation4], %s16
      %s18 = sshll.u32 [#allocation3], 4
      %s19 = int_to_ptr.vmem [resolvable:$true] %s18
      %24 = dma.hbm_to_vmem [thread:$0]  %s0, 1792, %s19, [#allocation4], 128, 128, 8
    $region5: #{tpu_custom_call.1} parent=1 // pred_fallthru
      _
    // Predicated region
    $region6: #{tpu_custom_call.1} parent=1 // pred_check
      _
    $region7: #{tpu_custom_call.1} parent=1 // pred_check_branch
      %26 = sbr.rel (0) target = $region9
    $region8: #{tpu_custom_call.1} parent=1 // pred_region
      %s28 = ssub.s32 896, 896
      %29 = vsyncadd [#allocation7], %s28
      %s30 = sshll.u32 [#allocation6], 4
      %s31 = int_to_ptr.vmem [resolvable:$true] %s30
      %36 = dma.hbm_to_vmem [thread:$0]  %s1, 896, %s31, [#allocation7], 128, 128, 8
    $region9: #{tpu_custom_call.1} parent=1 // pred_fallthru
      _
    // Predicated region
    $region10: #{tpu_custom_call.1} parent=1 // pred_check
      _
    $region11: #{tpu_custom_call.1} parent=1 // pred_check_branch
      %38 = sbr.rel (0) target = $region13
    $region12: #{tpu_custom_call.1} parent=1 // pred_region
      _
    $region13: #{tpu_custom_call.1} parent=1 // pred_fallthru
      _
    // Predicated region
    $region14: #{tpu_custom_call.1} parent=1 // pred_check
      _
    $region15: #{tpu_custom_call.1} parent=1 // pred_check_branch
      %40 = sbr.rel (0) target = $region17
    $region16: #{tpu_custom_call.1} parent=1 // pred_region
      _
    $region17: #{tpu_custom_call.1} parent=1 // pred_fallthru
      _
    // Predicated region
    $region18: #{tpu_custom_call.1} parent=1 // pred_check
      _
    $region19: #{tpu_custom_call.1} parent=1 // pred_check_branch
      %42 = sbr.rel (0) target = $region21
    $region20: #{tpu_custom_call.1} parent=1 // pred_region
      %43 = dma.done [#allocation4], 1792
    $region21: #{tpu_custom_call.1} parent=1 // pred_fallthru
      _
    // Predicated region
    $region22: #{tpu_custom_call.1} parent=1 // pred_check
      _
    $region23: #{tpu_custom_call.1} parent=1 // pred_check_branch
      %45 = sbr.rel (0) target = $region25
    $region24: #{tpu_custom_call.1} parent=1 // pred_region
      %46 = dma.done [#allocation7], 896
    $region25: #{tpu_custom_call.1} parent=1 // pred_fallthru
      _
    %v47 = vld [vmem:[#allocation6] sm:$0xff]
    %v48 = vld [vmem:[#allocation6 + $0x8] sm:$0xff]
    %v49 = vld [vmem:[#allocation6 + $0x10] sm:$0xff]
    %v50 = vld [vmem:[#allocation6 + $0x18] sm:$0xff]
    %v51 = vld [vmem:[#allocation6 + $0x20] sm:$0xff]
    %v52 = vld [vmem:[#allocation6 + $0x28] sm:$0xff]
    %v53 = vld [vmem:[#allocation6 + $0x30] sm:$0xff]
    %v54 = vld [vmem:[#allocation3] sm:$0xff]
    %v55 = vld [vmem:[#allocation3 + $0x8] sm:$0xff]
    %v56 = vld [vmem:[#allocation3 + $0x10] sm:$0xff]
    %v57 = vld [vmem:[#allocation3 + $0x18] sm:$0xff]
    %v58 = vld [vmem:[#allocation3 + $0x20] sm:$0xff]
    %v59 = vld [vmem:[#allocation3 + $0x28] sm:$0xff]
    %v60 = vld [vmem:[#allocation3 + $0x30] sm:$0xff]
    %v61 = vld [vmem:[#allocation3 + $0x38] sm:$0xff]
    %v62 = vld [vmem:[#allocation3 + $0x40] sm:$0xff]
    %v63 = vld [vmem:[#allocation3 + $0x48] sm:$0xff]
    %v64 = vld [vmem:[#allocation3 + $0x50] sm:$0xff]
    %v65 = vld [vmem:[#allocation3 + $0x58] sm:$0xff]
    %v66 = vld [vmem:[#allocation3 + $0x60] sm:$0xff]
    %v67 = vld [vmem:[#allocation3 + $0x68] sm:$0xff]
    %vm68 = vcmask 916480
    %v70 = vsel %vm68, %v47, 0
    %v73 = vsel %vm68, %v48, 0
    %v76 = vsel %vm68, %v49, 0
    %v79 = vsel %vm68, %v50, 0
    %v82 = vsel %vm68, %v51, 0
    %v85 = vsel %vm68, %v52, 0
    %v88 = vsel %vm68, %v53, 0
    %90 = vmatprep.subr.mxu0 0.0
    %91 = vmatpush1.msra.mxu0 0.0
    %92 = vmatprep.subr.mxu0 0.0
    %93 = vmatpush1.msra.mxu0 0.0
    %94 = vmatprep.subr.mxu0 0.0
    %95 = vmatpush1.msra.mxu0 %v67
    %96 = vmatprep.subr.mxu0 0.0
    %97 = vmatpush1.msra.mxu0 %v66
    %98 = vmatprep.subr.mxu0 0.0
    %99 = vmatpush1.msra.mxu0 %v65
    %100 = vmatprep.subr.mxu0 0.0
    %101 = vmatpush1.msra.mxu0 %v64
    %102 = vmatprep.subr.mxu0 0.0
    %103 = vmatpush1.msra.mxu0 %v63
    %104 = vmatprep.subr.mxu0 0.0
    %105 = vmatpush1.msra.mxu0 %v62
    %106 = vmatprep.subr.mxu0 0.0
    %107 = vmatpush1.msra.mxu0 %v61
    %108 = vmatprep.subr.mxu0 0.0
    %109 = vmatpush1.msra.mxu0 %v60
    %110 = vmatprep.subr.mxu0 0.0
    %111 = vmatpush1.msra.mxu0 %v59
    %112 = vmatprep.subr.mxu0 0.0
    %113 = vmatpush1.msra.mxu0 %v58
    %114 = vmatprep.subr.mxu0 0.0
    %115 = vmatpush1.msra.mxu0 %v57
    %116 = vmatprep.subr.mxu0 0.0
    %117 = vmatpush1.msra.mxu0 %v56
    %118 = vmatprep.subr.mxu0 0.0
    %119 = vmatpush1.msra.mxu0 %v55
    %120 = vmatprep.subr.mxu0 0.0
    %121 = vmatpush1.msra.mxu0 %v54
    %122 = vmatprep.subr.mxu0 0.0
    %123 = vmatpush2.msra.mxu0 0.0
    %124 = vmatprep.subr.mxu0 0.0
    %125 = vmatpush2.msra.mxu0 0.0
    %126 = vmatprep.subr.mxu0 0.0
    %127 = vmatpush2.msra.mxu0 0.0
    %128 = vmatprep.subr.mxu0 0.0
    %129 = vmatpush2.msra.mxu0 0.0
    %130 = vmatprep.subr.mxu0 0.0
    %131 = vmatpush2.msra.mxu0 0.0
    %132 = vmatprep.subr.mxu0 0.0
    %133 = vmatpush2.msra.mxu0 0.0
    %134 = vmatprep.subr.mxu0 0.0
    %135 = vmatpush2.msra.mxu0 0.0
    %136 = vmatprep.subr.mxu0 0.0
    %137 = vmatpush2.msra.mxu0 0.0
    %138 = vmatprep.subr.mxu0 0.0
    %139 = vmatpush2.msra.mxu0 0.0
    %140 = vmatprep.subr.mxu0 0.0
    %141 = vmatpush2.msra.mxu0 0.0
    %142 = vmatprep.subr.mxu0 0.0
    %143 = vmatpush2.msra.mxu0 0.0
    %144 = vmatprep.subr.mxu0 0.0
    %145 = vmatpush2.msra.mxu0 0.0
    %146 = vmatprep.subr.mxu0 0.0
    %147 = vmatpush2.msra.mxu0 0.0
    %148 = vmatprep.subr.mxu0 0.0
    %149 = vmatpush2.msra.mxu0 0.0
    %150 = vmatprep.subr.mxu0 0.0
    %151 = vmatpush2.msra.mxu0 0.0
    %152 = vmatprep.subr.mxu0 0.0
    %153 = vmatpush2.msra.mxu0 0.0
    %154 = vmatprep.mubr.f32.mxu0 0.0
    %155 = vmatmul.mubr.f32.gmra.mxu0 %v70
    %v156 = vpop.f32.mrf.mxu0
    %v157 = vadd.f32 0.0, %v156
    %v158 = vpop.f32.mrf.mxu0
    %159 = vmatprep.mubr.f32.mxu0 0.0
    %160 = vmatmul.mubr.f32.gmra.mxu0 %v73
    %v161 = vpop.f32.mrf.mxu0
    %v162 = vadd.f32 0.0, %v161
    %v163 = vpop.f32.mrf.mxu0
    %164 = vmatprep.mubr.f32.mxu0 0.0
    %165 = vmatmul.mubr.f32.gmra.mxu0 %v76
    %v166 = vpop.f32.mrf.mxu0
    %v167 = vadd.f32 0.0, %v166
    %v168 = vpop.f32.mrf.mxu0
    %169 = vmatprep.mubr.f32.mxu0 0.0
    %170 = vmatmul.mubr.f32.gmra.mxu0 %v79
    %v171 = vpop.f32.mrf.mxu0
    %v172 = vadd.f32 0.0, %v171
    %v173 = vpop.f32.mrf.mxu0
    %174 = vmatprep.mubr.f32.mxu0 0.0
    %175 = vmatmul.mubr.f32.gmra.mxu0 %v82
    %v176 = vpop.f32.mrf.mxu0
    %v177 = vadd.f32 0.0, %v176
    %v178 = vpop.f32.mrf.mxu0
    %179 = vmatprep.mubr.f32.mxu0 0.0
    %180 = vmatmul.mubr.f32.gmra.mxu0 %v85
    %v181 = vpop.f32.mrf.mxu0
    %v182 = vadd.f32 0.0, %v181
    %v183 = vpop.f32.mrf.mxu0
    %184 = vmatprep.mubr.f32.mxu0 0.0
    %185 = vmatmul.mubr.f32.gmra.mxu0 %v88
    %v186 = vpop.f32.mrf.mxu0
    %v187 = vadd.f32 0.0, %v186
    %v188 = vpop.f32.mrf.mxu0
    %189 = vdwg.mxu0
    %v190 = vmax.f32 %v157, 0.0
    %v191 = vmax.f32 %v162, 0.0
    %v192 = vmax.f32 %v167, 0.0
    %v193 = vmax.f32 %v172, 0.0
    %v194 = vmax.f32 %v177, 0.0
    %v195 = vmax.f32 %v182, 0.0
    %v196 = vmax.f32 %v187, 0.0
    %v197 = vld [vmem:[%s2] sm:$0x1]
    %s198 = sld [smem:[#allocation2]]
    %v199 = vstv %s198
    %vm200 = vcmask 457728
    %v202 = vsel %vm200, %v197, 0
    %204 = vmatprep.subr.mxu0 0.0
    %205 = vmatpush1.msra.mxu0 0.0
    %206 = vmatprep.subr.mxu0 0.0
    %207 = vmatpush1.msra.mxu0 0.0
    %208 = vmatprep.subr.mxu0 0.0
    %209 = vmatpush1.msra.mxu0 0.0
    %210 = vmatprep.subr.mxu0 0.0
    %211 = vmatpush1.msra.mxu0 0.0
    %212 = vmatprep.subr.mxu0 0.0
    %213 = vmatpush1.msra.mxu0 0.0
    %214 = vmatprep.subr.mxu0 0.0
    %215 = vmatpush1.msra.mxu0 0.0
    %216 = vmatprep.subr.mxu0 0.0
    %217 = vmatpush1.msra.mxu0 0.0
    %218 = vmatprep.subr.mxu0 0.0
    %219 = vmatpush1.msra.mxu0 0.0
    %220 = vmatprep.subr.mxu0 0.0
    %221 = vmatpush1.msra.mxu0 0.0
    %222 = vmatprep.subr.mxu0 0.0
    %223 = vmatpush1.msra.mxu0 %v196
    %224 = vmatprep.subr.mxu0 0.0
    %225 = vmatpush1.msra.mxu0 %v195
    %226 = vmatprep.subr.mxu0 0.0
    %227 = vmatpush1.msra.mxu0 %v194
    %228 = vmatprep.subr.mxu0 0.0
    %229 = vmatpush1.msra.mxu0 %v193
    %230 = vmatprep.subr.mxu0 0.0
    %231 = vmatpush1.msra.mxu0 %v192
    %232 = vmatprep.subr.mxu0 0.0
    %233 = vmatpush1.msra.mxu0 %v191
    %234 = vmatprep.subr.mxu0 0.0
    %235 = vmatpush1.msra.mxu0 %v190
    %236 = vmatprep.subr.mxu0 0.0
    %237 = vmatpush2.msra.mxu0 0.0
    %238 = vmatprep.subr.mxu0 0.0
    %239 = vmatpush2.msra.mxu0 0.0
    %240 = vmatprep.subr.mxu0 0.0
    %241 = vmatpush2.msra.mxu0 0.0
    %242 = vmatprep.subr.mxu0 0.0
    %243 = vmatpush2.msra.mxu0 0.0
    %244 = vmatprep.subr.mxu0 0.0
    %245 = vmatpush2.msra.mxu0 0.0
    %246 = vmatprep.subr.mxu0 0.0
    %247 = vmatpush2.msra.mxu0 0.0
    %248 = vmatprep.subr.mxu0 0.0
    %249 = vmatpush2.msra.mxu0 0.0
    %250 = vmatprep.subr.mxu0 0.0
    %251 = vmatpush2.msra.mxu0 0.0
    %252 = vmatprep.subr.mxu0 0.0
    %253 = vmatpush2.msra.mxu0 0.0
    %254 = vmatprep.subr.mxu0 0.0
    %255 = vmatpush2.msra.mxu0 0.0
    %256 = vmatprep.subr.mxu0 0.0
    %257 = vmatpush2.msra.mxu0 0.0
    %258 = vmatprep.subr.mxu0 0.0
    %259 = vmatpush2.msra.mxu0 0.0
    %260 = vmatprep.subr.mxu0 0.0
    %261 = vmatpush2.msra.mxu0 0.0
    %262 = vmatprep.subr.mxu0 0.0
    %263 = vmatpush2.msra.mxu0 0.0
    %264 = vmatprep.subr.mxu0 0.0
    %265 = vmatpush2.msra.mxu0 0.0
    %266 = vmatprep.subr.mxu0 0.0
    %267 = vmatpush2.msra.mxu0 0.0
    %268 = vmatprep.mubr.f32.mxu0 0.0
    %269 = vmatmul.mubr.f32.gmra.mxu0 %v202
    %v270 = vpop.f32.mrf.mxu0
    %v271 = vadd.f32 %v199, %v270
    %v272 = vpop.f32.mrf.mxu0
    %273 = vdwg.mxu0
    %274 = vst [vmem:[#allocation8] sm:$0x1] %v271
    // Predicated region
    $region26: #{tpu_custom_call.1} parent=1 // pred_check
      _
    $region27: #{tpu_custom_call.1} parent=1 // pred_check_branch
      %276 = sbr.rel (0) target = $region29
    $region28: #{tpu_custom_call.1} parent=1 // pred_region
      %s278 = ssub.s32 16, 16
      %279 = vsyncadd [#allocation5], %s278
      %s281 = sshll.u32 [#allocation8], 4
      %s282 = int_to_ptr.vmem [resolvable:$true] %s281
      %284 = dma.vmem_to_hbm [thread:$0]  %s282, 16, %s4, [#allocation5]
    $region29: #{tpu_custom_call.1} parent=1 // pred_fallthru
      _
    // Predicated region
    $region30: #{tpu_custom_call.1} parent=1 // pred_check
      _
    $region31: #{tpu_custom_call.1} parent=1 // pred_check_branch
      %286 = sbr.rel (0) target = $region33
    $region32: #{tpu_custom_call.1} parent=1 // pred_region
      %287 = dma.done [#allocation5], 16
    $region33: #{tpu_custom_call.1} parent=1 // pred_fallthru
      _
    %288 = vsyncpa [#allocation4], 1
    %289 = vsyncpa [#allocation7], 1
    %290 = vsyncpa [#allocation5], 1

</llo_original>
